<compile_context>
chip_gen: v5e
topology: v5e:2x2
jax: 0.10.0
libtpu: 0.0.40
codegen_flags: <defaults>
</compile_context>

<pallas_src>
import jax
import jax.numpy as jnp
from jax import lax
from jax.experimental import pallas as pl
from jax.experimental.pallas import tpu as pltpu


def _round_up(x, m):
    return ((x + m - 1) // m) * m


def _default_vmem_limit():
    """Generation-aware VMEM budget: physical capacity minus headroom."""
    try:
        cap = pltpu.get_tpu_info().vmem_capacity_bytes
        # ~12.5% headroom below physical, clamped to a sane range.
        return max(32 << 20, min(int(cap * 0.875), 112 << 20))
    except Exception:
        return 48 << 20   # safe on every generation (v7x physical is 64 MiB)


def _make_splade_kernel(B, S, CB, TV):
    """Kernel closure: B batches of S tokens, processed CB batches at a time."""
    n_chunks = B // CB

    def kernel(h_ref, w_ref, b_ref, mb_ref, o_ref):
        # h_ref : (B*S, D) bf16   resident hidden states
        # w_ref : (D, TV)  bf16   vocab-projection weight tile (streamed once)
        # b_ref : (1, TV)  f32    vocab bias tile
        # mb_ref: (B*S, 1) f32    additive mask bias (0 or -1e30)
        # o_ref : (B, TV)  f32    output tile
        w = w_ref[...]          # hoisted: read the W tile once per grid step
        b = b_ref[...]

        def chunk_vals(row_start, cb):
            rows = pl.ds(row_start, cb * S)
            # MXU matmul, f32 accumulation.  Only the dot happens per token.
            scores = jnp.dot(h_ref[rows, :], w,
                             preferred_element_type=jnp.float32)      # (cb*S, TV)
            scores = scores + mb_ref[rows, :]        # masked rows -> ~-1e30
            m = jnp.max(scores.reshape(cb, S, TV), axis=1)            # (cb, TV)
            # bias / relu / log1p hoisted past the max (all monotone):
            # all-masked rows give relu(-1e30 + bias) = 0, matching mask*log1p.
            return jnp.log1p(jnp.maximum(m + b, 0.0))

        if n_chunks == 1:
            o_ref[...] = chunk_vals(0, B)
        else:
            def body(c, carry):
                row_start = pl.multiple_of(c * (CB * S), CB * S)
                out_start = pl.multiple_of(c * CB, CB)
                o_ref[pl.ds(out_start, CB), :] = chunk_vals(row_start, CB)
                return carry
            lax.fori_loop(0, n_chunks, body, 0, unroll=n_chunks <= 8)

    return kernel


def splade_pool(hidden, w, bias, mask, *, tv_target=2048,
                chunk_bytes=8 << 20, vmem_limit_bytes=None):
    """hidden: (B, S, D), w: (D, V), bias: (V,), mask: (B, S)  ->  (B, V) f32."""
    B, S, D = hidden.shape
    V = w.shape[1]

    # --- vocab tiling: tv is a multiple of 128; pad V up so tv | Vp. ---------
    tv = min(tv_target, _round_up(V, 128))
    tv = _round_up(tv, 128)
    Vp = _round_up(V, tv)
    n_vtiles = Vp // tv

    # --- batch chunking: bound the f32 scores intermediate per step. --------
    max_cb = max(1, chunk_bytes // (S * tv * 4))
    cb = 1
    for d in range(1, B + 1):
        if B % d == 0 and d <= max_cb:
            cb = d

    if vmem_limit_bytes is None:
        vmem_limit_bytes = _default_vmem_limit()

    # --- operand prep (bf16 matmul operands, f32 epilogue operands). --------
    h2 = hidden.reshape(B * S, D).astype(jnp.bfloat16)
    w16 = w.astype(jnp.bfloat16)
    bias2 = bias.astype(jnp.float32)
    if Vp > V:
        w16 = jnp.pad(w16, ((0, 0), (0, Vp - V)))
        bias2 = jnp.pad(bias2, (0, Vp - V))
    bias2 = bias2.reshape(1, Vp)
    # additive mask bias: 0 for kept tokens, -1e30 for masked tokens.
    mb2 = ((mask.astype(jnp.float32) - 1.0) * 1e30).reshape(B * S, 1)

    cost = pl.CostEstimate(
        flops=2 * B * S * D * Vp,
        transcendentals=B * Vp,                 # log1p only on the pooled result
        bytes_accessed=(w16.size * 2 + h2.size * 2 + B * Vp * 4
                        + Vp * 4 + B * S * 4),
    )

    kernel = _make_splade_kernel(B, S, cb, tv)
    small_m = (B * S) < 1024                    # W-bandwidth-bound regime

    def _call(with_pipeline_hints):
        def spec(shape, imap, mode=None):
            if with_pipeline_hints and mode is not None:
                return pl.BlockSpec(shape, imap, pipeline_mode=mode)
            return pl.BlockSpec(shape, imap)

        in_specs = [
            # hidden: resident across the whole grid -> single buffer is enough.
            spec((B * S, D), lambda j: (0, 0), pl.Buffered(1)),
            # W tile: streamed once; deepen pipeline when compute per tile is short.
            spec((D, tv), lambda j: (0, j),
                 pl.Buffered(3) if (small_m and n_vtiles >= 3) else None),
            # bias tile
            spec((1, tv), lambda j: (0, j)),
            # additive mask bias: resident.
            spec((B * S, 1), lambda j: (0, 0), pl.Buffered(1)),
        ]
        out_spec = pl.BlockSpec((B, tv), lambda j: (0, j))

        return pl.pallas_call(
            kernel,
            out_shape=jax.ShapeDtypeStruct((B, Vp), jnp.float32),
            grid_spec=pltpu.PrefetchScalarGridSpec(
                num_scalar_prefetch=0,
                grid=(n_vtiles,),
                in_specs=in_specs,
                out_specs=out_spec,
            ),
            compiler_params=pltpu.CompilerParams(
                dimension_semantics=("parallel",),   # vocab axis shards across TCs
                vmem_limit_bytes=vmem_limit_bytes),
            cost_estimate=cost,
        )(h2, w16, bias2, mb2)

    try:
        out = _call(True)
    except Exception:
        # pipeline_mode hints not supported by this jax/Mosaic version.
        out = _call(False)

    return out[:, :V]


def synthetic_encoder(input_ids, emb, w_ff, b_ff):
    """Tiny deterministic stand-in for the transformer body: embed + dense + gelu."""
    h = emb[input_ids]                         # (B, S, D)
    h = jax.nn.gelu(h @ w_ff + b_ff)           # (B, S, D)
    return h


if __name__ == "__main__":
    B, S, D, V = 2, 8, 32, 256                 # batch, seq, hidden, vocab

    key = jax.random.PRNGKey(0)
    k1, k2, k3, k4, k5, k6 = jax.random.split(key, 6)

    # deterministic synthetic parameters
    emb   = jax.random.normal(k1, (V, D), jnp.float32) * 0.5
    w_ff  = jax.random.normal(k2, (D, D), jnp.float32) * 0.1
    b_ff  = jax.random.normal(k3, (D,),   jnp.float32) * 0.1
    w_mlm = jax.random.normal(k4, (D, V), jnp.float32) * 0.2   # MLM decoder weight
    b_mlm = jax.random.normal(k5, (V,),   jnp.float32) * 0.1   # MLM decoder bias

    # deterministic synthetic inputs (kwargs of the PyTorch forward)
    input_ids = jax.random.randint(k6, (B, S), 0, V, jnp.int32)
    attention_mask = jnp.array(
        [[1, 1, 1, 1, 1, 1, 0, 0],
         [1, 1, 1, 1, 0, 0, 0, 0]], dtype=jnp.int32)            # (B, S)

    # glue: synthetic transformer body producing hidden states
    hidden = synthetic_encoder(input_ids, emb, w_ff, b_ff)       # (B, S, D)

    # Pallas kernel: vocab projection + SPLADE pooling
    out = splade_pool(hidden, w_mlm, b_mlm, attention_mask)      # (B, V)
    out = jax.block_until_ready(out)

    # pure-JAX reference of the PyTorch forward semantics, using the same
    # bf16-rounded matmul operands the kernel sees (f32 accumulation).
    h_bf = hidden.astype(jnp.bfloat16).astype(jnp.float32)
    w_bf = w_mlm.astype(jnp.bfloat16).astype(jnp.float32)
    logits_ref = h_bf @ w_bf + b_mlm                             # (B, S, V)
    ref = jnp.max(
        jnp.log1p(jnp.maximum(logits_ref, 0.0))
        * attention_mask.astype(jnp.float32)[:, :, None],
        axis=1,
    )
    assert out.shape == (B, V)
    assert jnp.allclose(out, ref, atol=1e-4, rtol=1e-4), "mismatch vs reference"

    print("KERNEL_OK")
</pallas_src>

<mosaic_0001>
module attributes {stable_mosaic.version = 11 : i64} {
  func.func @kernel(%arg0: i32, %arg1: memref<16x32xbf16, #tpu.memory_space<vmem>>, %arg2: memref<32x256xbf16, #tpu.memory_space<vmem>>, %arg3: memref<1x256xf32, #tpu.memory_space<vmem>>, %arg4: memref<16x1xf32, #tpu.memory_space<vmem>>, %arg5: memref<2x256xf32, #tpu.memory_space<vmem>>) attributes {dimension_semantics = [#tpu.dimension_semantics<parallel>], iteration_bounds = array<i64: 1>, scalar_prefetch = 0 : i64, scratch_operands = 0 : i64, tpu.core_type = #tpu.core_type<tc>, window_params = [{pipeline_mode = #tpu.pipeline_mode<synchronous>, transform_indices = @transform_0, window_bounds = array<i64: 16, 32>}, {transform_indices = @transform_1, window_bounds = array<i64: 32, 256>}, {transform_indices = @transform_2, window_bounds = array<i64: 1, 256>}, {pipeline_mode = #tpu.pipeline_mode<synchronous>, transform_indices = @transform_3, window_bounds = array<i64: 16, 1>}, {transform_indices = @transform_4, window_bounds = array<i64: 2, 256>}]} {
    %c0 = arith.constant 0 : index
    %c0_0 = arith.constant 0 : index
    %0 = vector.load %arg2[%c0, %c0_0] : memref<32x256xbf16, #tpu.memory_space<vmem>>, vector<32x256xbf16>
    %c0_1 = arith.constant 0 : index
    %c0_2 = arith.constant 0 : index
    %1 = vector.load %arg3[%c0_1, %c0_2] : memref<1x256xf32, #tpu.memory_space<vmem>>, vector<1x256xf32>
    %c0_3 = arith.constant 0 : index
    %c0_4 = arith.constant 0 : index
    %2 = vector.load %arg1[%c0_3, %c0_4] : memref<16x32xbf16, #tpu.memory_space<vmem>>, vector<16x32xbf16>
    %cst = arith.constant dense<0.000000e+00> : vector<16x256xf32>
    %3 = tpu.matmul %2, %0, %cst {dimension_numbers = #tpu.dot_dimension_numbers<[1], [0], [0], [1], [0, 0, 1, 1], [], []>} : vector<16x32xbf16>, vector<32x256xbf16>, vector<16x256xf32> -> vector<16x256xf32>
    %c0_5 = arith.constant 0 : index
    %c0_6 = arith.constant 0 : index
    %4 = vector.load %arg4[%c0_5, %c0_6] : memref<16x1xf32, #tpu.memory_space<vmem>>, vector<16x1xf32>
    %5 = vector.broadcast %4 : vector<16x1xf32> to vector<16x256xf32>
    %6 = arith.addf %3, %5 : vector<16x256xf32>
    %7 = vector.shape_cast %6 : vector<16x256xf32> to vector<2x8x256xf32>
    %cst_7 = arith.constant dense<0xFF800000> : vector<2x256xf32>
    %8 = vector.multi_reduction <maximumf>, %7, %cst_7 [1] : vector<2x8x256xf32> to vector<2x256xf32>
    %9 = vector.broadcast %1 : vector<1x256xf32> to vector<2x256xf32>
    %10 = arith.addf %8, %9 : vector<2x256xf32>
    %cst_8 = arith.constant 0.000000e+00 : f32
    %11 = vector.broadcast %cst_8 : f32 to vector<2x256xf32>
    %12 = arith.maximumf %10, %11 : vector<2x256xf32>
    %13 = math.log1p %12 : vector<2x256xf32>
    %c0_9 = arith.constant 0 : index
    %c0_10 = arith.constant 0 : index
    %14 = vector.load %arg5[%c0_9, %c0_10] : memref<2x256xf32, #tpu.memory_space<vmem>>, vector<2x256xf32>
    tpu.vector_store %arg5[%c0_9, %c0_10], %13 {strides = array<i32>} : memref<2x256xf32, #tpu.memory_space<vmem>>, vector<2x256xf32>,
    return
  }
  func.func @transform_0(%arg0: i32) -> (i32, i32) {
    %c0_i32 = arith.constant 0 : i32
    %c0_i32_0 = arith.constant 0 : i32
    %c0_i32_1 = arith.constant 0 : i32
    return %c0_i32, %c0_i32_0 : i32, i32
  }
  func.func @transform_1(%arg0: i32) -> (i32, i32) {
    %c0_i32 = arith.constant 0 : i32
    %c0_i32_0 = arith.constant 0 : i32
    return %c0_i32, %arg0 : i32, i32
  }
  func.func @transform_2(%arg0: i32) -> (i32, i32) {
    %c0_i32 = arith.constant 0 : i32
    %c0_i32_0 = arith.constant 0 : i32
    return %c0_i32, %arg0 : i32, i32
  }
  func.func @transform_3(%arg0: i32) -> (i32, i32) {
    %c0_i32 = arith.constant 0 : i32
    %c0_i32_0 = arith.constant 0 : i32
    %c0_i32_1 = arith.constant 0 : i32
    return %c0_i32, %c0_i32_0 : i32, i32
  }
  func.func @transform_4(%arg0: i32) -> (i32, i32) {
    %c0_i32 = arith.constant 0 : i32
    %c0_i32_0 = arith.constant 0 : i32
    return %c0_i32, %arg0 : i32, i32
  }
}

module attributes {stable_mosaic.version = 11 : i64} {
  func.func @kernel(%arg0: i32, %arg1: memref<16x32xbf16, #tpu.memory_space<vmem>>, %arg2: memref<32x256xbf16, #tpu.memory_space<vmem>>, %arg3: memref<1x256xf32, #tpu.memory_space<vmem>>, %arg4: memref<16x1xf32, #tpu.memory_space<vmem>>, %arg5: memref<2x256xf32, #tpu.memory_space<vmem>>) attributes {dimension_semantics = [#tpu.dimension_semantics<parallel>], iteration_bounds = array<i64: 1>, scalar_prefetch = 0 : i64, scratch_operands = 0 : i64, tpu.core_type = #tpu.core_type<tc>, window_params = [{pipeline_mode = #tpu.pipeline_mode<synchronous>, transform_indices = @transform_0, window_bounds = array<i64: 16, 32>}, {transform_indices = @transform_1, window_bounds = array<i64: 32, 256>}, {transform_indices = @transform_2, window_bounds = array<i64: 1, 256>}, {pipeline_mode = #tpu.pipeline_mode<synchronous>, transform_indices = @transform_3, window_bounds = array<i64: 16, 1>}, {transform_indices = @transform_4, window_bounds = array<i64: 2, 256>}]} {
    %c0 = arith.constant 0 : index
    %c0_0 = arith.constant 0 : index
    %0 = vector.load %arg2[%c0, %c0_0] : memref<32x256xbf16, #tpu.memory_space<vmem>>, vector<32x256xbf16>
    %c0_1 = arith.constant 0 : index
    %c0_2 = arith.constant 0 : index
    %1 = vector.load %arg3[%c0_1, %c0_2] : memref<1x256xf32, #tpu.memory_space<vmem>>, vector<1x256xf32>
    %c0_3 = arith.constant 0 : index
    %c0_4 = arith.constant 0 : index
    %2 = vector.load %arg1[%c0_3, %c0_4] : memref<16x32xbf16, #tpu.memory_space<vmem>>, vector<16x32xbf16>
    %cst = arith.constant dense<0.000000e+00> : vector<16x256xf32>
    %3 = tpu.matmul %2, %0, %cst {dimension_numbers = #tpu.dot_dimension_numbers<[1], [0], [0], [1], [0, 0, 1, 1], [], []>} : vector<16x32xbf16>, vector<32x256xbf16>, vector<16x256xf32> -> vector<16x256xf32>
    %c0_5 = arith.constant 0 : index
    %c0_6 = arith.constant 0 : index
    %4 = vector.load %arg4[%c0_5, %c0_6] : memref<16x1xf32, #tpu.memory_space<vmem>>, vector<16x1xf32>
    %5 = vector.broadcast %4 : vector<16x1xf32> to vector<16x256xf32>
    %6 = arith.addf %3, %5 : vector<16x256xf32>
    %7 = vector.shape_cast %6 : vector<16x256xf32> to vector<2x8x256xf32>
    %cst_7 = arith.constant dense<0xFF800000> : vector<2x256xf32>
    %8 = vector.multi_reduction <maximumf>, %7, %cst_7 [1] : vector<2x8x256xf32> to vector<2x256xf32>
    %9 = vector.broadcast %1 : vector<1x256xf32> to vector<2x256xf32>
    %10 = arith.addf %8, %9 : vector<2x256xf32>
    %cst_8 = arith.constant 0.000000e+00 : f32
    %11 = vector.broadcast %cst_8 : f32 to vector<2x256xf32>
    %12 = arith.maximumf %10, %11 : vector<2x256xf32>
    %13 = math.log1p %12 : vector<2x256xf32>
    %c0_9 = arith.constant 0 : index
    %c0_10 = arith.constant 0 : index
    %14 = vector.load %arg5[%c0_9, %c0_10] : memref<2x256xf32, #tpu.memory_space<vmem>>, vector<2x256xf32>
    tpu.vector_store %arg5[%c0_9, %c0_10], %13 {strides = array<i32>} : memref<2x256xf32, #tpu.memory_space<vmem>>, vector<2x256xf32>,
    return
  }
  func.func @transform_0(%arg0: i32) -> (i32, i32) {
    %c0_i32 = arith.constant 0 : i32
    %c0_i32_0 = arith.constant 0 : i32
    %c0_i32_1 = arith.constant 0 : i32
    return %c0_i32, %c0_i32_0 : i32, i32
  }
  func.func @transform_1(%arg0: i32) -> (i32, i32) {
    %c0_i32 = arith.constant 0 : i32
    %c0_i32_0 = arith.constant 0 : i32
    return %c0_i32, %arg0 : i32, i32
  }
  func.func @transform_2(%arg0: i32) -> (i32, i32) {
    %c0_i32 = arith.constant 0 : i32
    %c0_i32_0 = arith.constant 0 : i32
    return %c0_i32, %arg0 : i32, i32
  }
  func.func @transform_3(%arg0: i32) -> (i32, i32) {
    %c0_i32 = arith.constant 0 : i32
    %c0_i32_0 = arith.constant 0 : i32
    %c0_i32_1 = arith.constant 0 : i32
    return %c0_i32, %c0_i32_0 : i32, i32
  }
  func.func @transform_4(%arg0: i32) -> (i32, i32) {
    %c0_i32 = arith.constant 0 : i32
    %c0_i32_0 = arith.constant 0 : i32
    return %c0_i32, %arg0 : i32, i32
  }
}

</mosaic_0001>

<llo_original>
// kernel: tpu_custom_call.1
$region0: #{tpu_custom_call.1}
  #allocation0 [shape = 'u32[]', space=smem, size = 0x4, offset = 0x4, fixed_abs, tag = 'smem constant byte address 0x4 - core index']
  #allocation1 [shape = 'u32[72,128]{1,0:T(1,128)}', space=vmem, size = 0x9000, scoped, tag = 'internal scratch']
  %s0 = inlined_call_operand.vmem [shape: bf16[16,32], index: 0, kind: input, shape index: {}]
  %s1 = inlined_call_operand.hbm [shape: bf16[32,256], index: 1, kind: input, shape index: {}]
  %s2 = inlined_call_operand.vmem [shape: f32[1,256], index: 2, kind: input, shape index: {}]
  %s3 = inlined_call_operand.vmem [shape: f32[16,1], index: 3, kind: input, shape index: {}]
  %s4 = inlined_call_operand.hbm [shape: f32[2,256], index: 4, kind: output, shape index: {}]
  %s5 = sld [smem:[#allocation0]]
  $region30: #{tpu_custom_call.1} parent=0
    _
  %s7 = ssub.s32 1, %s5
  %s8 = scalar_select 0, %s7, %s5
  $region1: #{tpu_custom_call.1} parent=0
    #allocation2 [shape = 'u8[16384]{0}', space=vmem, size = 0x4000, scoped, tag = 'input window, operand 1, single buffered']
    #allocation3 [shape = 's32[1]{0}', space=sflag, size = 0x4, scoped, tag = 'scoped memory for tpu_custom_call.1']
    #allocation4 [shape = 's32[1]{0}', space=sflag, size = 0x4, scoped, tag = 'scoped memory for tpu_custom_call.1']
    #allocation5 [shape = 'u8[2048]{0}', space=vmem, size = 0x800, scoped, tag = 'output window, operand 0, single buffered']
    %9 = vsyncpa [#allocation3], 0
    %10 = vsyncpa [#allocation4], 0
    // Predicated region
    $region2: #{tpu_custom_call.1} parent=1 // pred_check
      _
    $region3: #{tpu_custom_call.1} parent=1 // pred_check_branch
      %12 = sbr.rel (0) target = $region5
    $region4: #{tpu_custom_call.1} parent=1 // pred_region
      _
    $region5: #{tpu_custom_call.1} parent=1 // pred_fallthru
      _
    // Predicated region
    $region6: #{tpu_custom_call.1} parent=1 // pred_check
      _
    $region7: #{tpu_custom_call.1} parent=1 // pred_check_branch
      %14 = sbr.rel (0) target = $region9
    $region8: #{tpu_custom_call.1} parent=1 // pred_region
      %16 = vsyncadd [#allocation3], 0
      %s17 = sshll.u32 %s1, 4
      %s18 = int_to_ptr.hbm [resolvable:$true] %s17
      %s19 = sshll.u32 [#allocation2], 4
      %s20 = int_to_ptr.vmem [resolvable:$true] %s19
      %25 = dma.hbm_to_vmem [thread:$0]  %s18, 512, %s20, [#allocation3], 128, 128, 8
    $region9: #{tpu_custom_call.1} parent=1 // pred_fallthru
      _
    // Predicated region
    $region10: #{tpu_custom_call.1} parent=1 // pred_check
      _
    $region11: #{tpu_custom_call.1} parent=1 // pred_check_branch
      %27 = sbr.rel (0) target = $region13
    $region12: #{tpu_custom_call.1} parent=1 // pred_region
      _
    $region13: #{tpu_custom_call.1} parent=1 // pred_fallthru
      _
    // Predicated region
    $region14: #{tpu_custom_call.1} parent=1 // pred_check
      _
    $region15: #{tpu_custom_call.1} parent=1 // pred_check_branch
      %29 = sbr.rel (0) target = $region17
    $region16: #{tpu_custom_call.1} parent=1 // pred_region
      _
    $region17: #{tpu_custom_call.1} parent=1 // pred_fallthru
      _
    // Predicated region
    $region18: #{tpu_custom_call.1} parent=1 // pred_check
      _
    $region19: #{tpu_custom_call.1} parent=1 // pred_check_branch
      %31 = sbr.rel (0) target = $region21
    $region20: #{tpu_custom_call.1} parent=1 // pred_region
      %33 = dma.done [#allocation3], 512
    $region21: #{tpu_custom_call.1} parent=1 // pred_fallthru
      _
    %v35 = vld [vmem:[#allocation2] sm:$0xff]
    %v36 = vld [vmem:[#allocation2 + $0x8] sm:$0xff]
    %v37 = vld [vmem:[#allocation2 + $0x10] sm:$0xff]
    %v38 = vld [vmem:[#allocation2 + $0x18] sm:$0xff]
    %v39 = vld [vmem:[%s2] sm:$0x3]
    %v40 = vld [vmem:[%s0] sm:$0xf]
    %v41 = vld [vmem:[%s0 + $0x4] sm:$0xf]
    %v42 = vld [vmem:[%s3] sm:$0xff]
    %v43 = vld [vmem:[%s3 + $0x8] sm:$0xff]
    %45 = vset.pattern.permute.xlu0 0
    %46 = vperm.xlu0 %45, %v42
    %v47 = vpop.permute.xlu0 %46
    %50 = vset.pattern.permute.xlu0 0
    %51 = vperm.xlu0 %50, %v43
    %v52 = vpop.permute.xlu0 %51
    %v56 = vunpack.c.l.b16 %v40
    %v57 = vunpack.c.l.b16 %v41
    %v58 = vpack.c.b16 %v57, %v56
    %v63 = vunpack.c.l.b16 %v35
    %v64 = vunpack.c.h.b16 %v35
    %v65 = vunpack.c.l.b16 %v36
    %v66 = vunpack.c.h.b16 %v36
    %v67 = vunpack.c.l.b16 %v37
    %v68 = vunpack.c.h.b16 %v37
    %v69 = vunpack.c.l.b16 %v38
    %v70 = vunpack.c.h.b16 %v38
    %v71 = vpack.c.b16 %v65, %v63
    %v72 = vpack.c.b16 %v66, %v64
    %v73 = vpack.c.b16 %v69, %v67
    %v74 = vpack.c.b16 %v70, %v68
    %vm79 = vcmask 261120
    %v81 = vsel %vm79, %v58, 0
    %83 = vmatpush.bf16.msra.mxu0 0
    %84 = vmatpush.bf16.msra.mxu0 0
    %85 = vmatpush.bf16.msra.mxu0 0
    %86 = vmatpush.bf16.msra.mxu0 0
    %87 = vmatpush.bf16.msra.mxu0 0
    %88 = vmatpush.bf16.msra.mxu0 0
    %89 = vmatpush.bf16.msra.mxu0 %v73
    %90 = vmatpush.bf16.msra.mxu0 %v71
    %91 = vmatmul.bf16.gmra.mxu0 %v81
    %v92 = vpop.f32.mrf.mxu0
    %v93 = vadd.f32 %v47, %v92
    %v94 = vpop.f32.mrf.mxu0
    %v95 = vadd.f32 %v52, %v94
    %96 = vdwg.mxu0
    %97 = vmatpush.bf16.msra.mxu0 0
    %98 = vmatpush.bf16.msra.mxu0 0
    %99 = vmatpush.bf16.msra.mxu0 0
    %100 = vmatpush.bf16.msra.mxu0 0
    %101 = vmatpush.bf16.msra.mxu0 0
    %102 = vmatpush.bf16.msra.mxu0 0
    %103 = vmatpush.bf16.msra.mxu0 %v74
    %104 = vmatpush.bf16.msra.mxu0 %v72
    %105 = vmatmul.bf16.gmra.mxu0 %v81
    %v106 = vpop.f32.mrf.mxu0
    %v107 = vadd.f32 %v47, %v106
    %v108 = vpop.f32.mrf.mxu0
    %v109 = vadd.f32 %v52, %v108
    %110 = vdwg.mxu0
    %v111 = vrot.slane %v93, 4
    %v112 = vmax.f32 %v93, %v111
    %v113 = vrot.slane %v112, 2
    %v114 = vmax.f32 %v112, %v113
    %v115 = vrot.slane %v114, 1
    %v116 = vmax.f32 %v114, %v115
    %v117 = vrot.slane %v107, 4
    %v118 = vmax.f32 %v107, %v117
    %v119 = vrot.slane %v118, 2
    %v120 = vmax.f32 %v118, %v119
    %v121 = vrot.slane %v120, 1
    %v122 = vmax.f32 %v120, %v121
    %v123 = vrot.slane %v95, 4
    %v124 = vmax.f32 %v95, %v123
    %v125 = vrot.slane %v124, 2
    %v126 = vmax.f32 %v124, %v125
    %v127 = vrot.slane %v126, 1
    %v128 = vmax.f32 %v126, %v127
    %v129 = vrot.slane %v109, 4
    %v130 = vmax.f32 %v109, %v129
    %v131 = vrot.slane %v130, 2
    %v132 = vmax.f32 %v130, %v131
    %v133 = vrot.slane %v132, 1
    %v134 = vmax.f32 %v132, %v133
    %v136 = vperm.slane %v39, 0
    %v137 = vperm.slane %v39, 1
    %v140 = vadd.f32 %v116, %v136
    %v141 = vadd.f32 %v122, %v137
    %v142 = vadd.f32 %v128, %v136
    %v143 = vadd.f32 %v134, %v137
    %v144 = vmax.f32 %v140, 0.0
    %v145 = vmax.f32 %v141, 0.0
    %v146 = vmax.f32 %v142, 0.0
    %v147 = vmax.f32 %v143, 0.0
    %v148 = vadd.f32 %v144, 1.0
    %v149 = vlog2.pop %v148
    %v150 = vmul.f32 %v149, 0.6931472
    %v151 = vmul.f32 -0.5, %v144
    %v152 = vadd.f32 %v151, 1.0
    %v153 = vmul.f32 %v152, %v144
    %v154 = vand.u32 2147483647, %v144
    %vm155 = vcmp.lt.f32.partialorder %v154, 0.0004427343
    %v156 = vsel %vm155, %v153, %v150
    %v157 = vadd.f32 %v145, 1.0
    %v158 = vlog2.pop %v157
    %v159 = vmul.f32 %v158, 0.6931472
    %v160 = vmul.f32 -0.5, %v145
    %v161 = vadd.f32 %v160, 1.0
    %v162 = vmul.f32 %v161, %v145
    %v163 = vand.u32 2147483647, %v145
    %vm164 = vcmp.lt.f32.partialorder %v163, 0.0004427343
    %v165 = vsel %vm164, %v162, %v159
    %v166 = vadd.f32 %v146, 1.0
    %v167 = vlog2.pop %v166
    %v168 = vmul.f32 %v167, 0.6931472
    %v169 = vmul.f32 -0.5, %v146
    %v170 = vadd.f32 %v169, 1.0
    %v171 = vmul.f32 %v170, %v146
    %v172 = vand.u32 2147483647, %v146
    %vm173 = vcmp.lt.f32.partialorder %v172, 0.0004427343
    %v174 = vsel %vm173, %v171, %v168
    %v175 = vadd.f32 %v147, 1.0
    %v176 = vlog2.pop %v175
    %v177 = vmul.f32 %v176, 0.6931472
    %v178 = vmul.f32 -0.5, %v147
    %v179 = vadd.f32 %v178, 1.0
    %v180 = vmul.f32 %v179, %v147
    %v181 = vand.u32 2147483647, %v147
    %vm182 = vcmp.lt.f32.partialorder %v181, 0.0004427343
    %v183 = vsel %vm182, %v180, %v177
    %v188 = vrot.slane %v165, 6
    %v189 = vrot.slane %v183, 6
    %vm190 = vcmask 1041408
    %v191 = vsel %vm190, %v156, %v188
    %v192 = vsel %vm190, %v174, %v189
    %vm193 = vcmask 1044484
    %v194 = vsel %vm193, %v191, %v191
    %vm195 = vcmask 1046534
    %v196 = vsel %vm195, %v191, %v194
    %v197 = vrot.slane %v192, 7
    %vm198 = vcmask 1041409
    %v199 = vsel %vm198, %v197, %v196
    %vm200 = vcmask 1043459
    %v201 = vsel %vm200, %v197, %v199
    %vm202 = vcmask 1045509
    %v203 = vsel %vm202, %v197, %v201
    %vm204 = vcmask 1047559
    %v205 = vsel %vm204, %v197, %v203
    %207 = vst [vmem:[#allocation5] sm:$0xf] %v205
    // Predicated region
    $region22: #{tpu_custom_call.1} parent=1 // pred_check
      _
    $region23: #{tpu_custom_call.1} parent=1 // pred_check_branch
      %209 = sbr.rel (0) target = $region25
    $region24: #{tpu_custom_call.1} parent=1 // pred_region
      %211 = vsyncadd [#allocation4], 0
      %s213 = sshll.u32 [#allocation5], 4
      %s214 = int_to_ptr.vmem [resolvable:$true] %s213
      %s215 = sshll.u32 %s4, 4
      %s216 = int_to_ptr.hbm [resolvable:$true] %s215
      %218 = dma.vmem_to_hbm [thread:$0]  %s214, 64, %s216, [#allocation4]
    $region25: #{tpu_custom_call.1} parent=1 // pred_fallthru
      _
    // Predicated region
    $region26: #{tpu_custom_call.1} parent=1 // pred_check
      _
    $region27: #{tpu_custom_call.1} parent=1 // pred_check_branch
      %220 = sbr.rel (0) target = $region29
    $region28: #{tpu_custom_call.1} parent=1 // pred_region
      %222 = dma.done [#allocation4], 64
    $region29: #{tpu_custom_call.1} parent=1 // pred_fallthru
      _
    %223 = vsyncpa [#allocation3], 1
    %224 = vsyncpa [#allocation4], 1

// kernel: tpu_custom_call.1
$region0: #{tpu_custom_call.1}
  #allocation0 [shape = 'u32[]', space=smem, size = 0x4, offset = 0x4, fixed_abs, tag = 'smem constant byte address 0x4 - core index']
  #allocation1 [shape = 'u32[72,128]{1,0:T(1,128)}', space=vmem, size = 0x9000, scoped, tag = 'internal scratch']
  %s0 = inlined_call_operand.vmem [shape: bf16[16,32], index: 0, kind: input, shape index: {}]
  %s1 = inlined_call_operand.hbm [shape: bf16[32,256], index: 1, kind: input, shape index: {}]
  %s2 = inlined_call_operand.vmem [shape: f32[1,256], index: 2, kind: input, shape index: {}]
  %s3 = inlined_call_operand.vmem [shape: f32[16,1], index: 3, kind: input, shape index: {}]
  %s4 = inlined_call_operand.hbm [shape: f32[2,256], index: 4, kind: output, shape index: {}]
  %s5 = sld [smem:[#allocation0]]
  $region30: #{tpu_custom_call.1} parent=0
    _
  %s7 = ssub.s32 1, %s5
  %s8 = scalar_select 0, %s7, %s5
  $region1: #{tpu_custom_call.1} parent=0
    #allocation2 [shape = 'u8[16384]{0}', space=vmem, size = 0x4000, scoped, tag = 'input window, operand 1, single buffered']
    #allocation3 [shape = 's32[1]{0}', space=sflag, size = 0x4, scoped, tag = 'scoped memory for tpu_custom_call.1']
    #allocation4 [shape = 's32[1]{0}', space=sflag, size = 0x4, scoped, tag = 'scoped memory for tpu_custom_call.1']
    #allocation5 [shape = 'u8[2048]{0}', space=vmem, size = 0x800, scoped, tag = 'output window, operand 0, single buffered']
    %9 = vsyncpa [#allocation3], 0
    %10 = vsyncpa [#allocation4], 0
    // Predicated region
    $region2: #{tpu_custom_call.1} parent=1 // pred_check
      _
    $region3: #{tpu_custom_call.1} parent=1 // pred_check_branch
      %12 = sbr.rel (0) target = $region5
    $region4: #{tpu_custom_call.1} parent=1 // pred_region
      _
    $region5: #{tpu_custom_call.1} parent=1 // pred_fallthru
      _
    // Predicated region
    $region6: #{tpu_custom_call.1} parent=1 // pred_check
      _
    $region7: #{tpu_custom_call.1} parent=1 // pred_check_branch
      %14 = sbr.rel (0) target = $region9
    $region8: #{tpu_custom_call.1} parent=1 // pred_region
      %16 = vsyncadd [#allocation3], 0
      %s17 = sshll.u32 %s1, 4
      %s18 = int_to_ptr.hbm [resolvable:$true] %s17
      %s19 = sshll.u32 [#allocation2], 4
      %s20 = int_to_ptr.vmem [resolvable:$true] %s19
      %25 = dma.hbm_to_vmem [thread:$0]  %s18, 512, %s20, [#allocation3], 128, 128, 8
    $region9: #{tpu_custom_call.1} parent=1 // pred_fallthru
      _
    // Predicated region
    $region10: #{tpu_custom_call.1} parent=1 // pred_check
      _
    $region11: #{tpu_custom_call.1} parent=1 // pred_check_branch
      %27 = sbr.rel (0) target = $region13
    $region12: #{tpu_custom_call.1} parent=1 // pred_region
      _
    $region13: #{tpu_custom_call.1} parent=1 // pred_fallthru
      _
    // Predicated region
    $region14: #{tpu_custom_call.1} parent=1 // pred_check
      _
    $region15: #{tpu_custom_call.1} parent=1 // pred_check_branch
      %29 = sbr.rel (0) target = $region17
    $region16: #{tpu_custom_call.1} parent=1 // pred_region
      _
    $region17: #{tpu_custom_call.1} parent=1 // pred_fallthru
      _
    // Predicated region
    $region18: #{tpu_custom_call.1} parent=1 // pred_check
      _
    $region19: #{tpu_custom_call.1} parent=1 // pred_check_branch
      %31 = sbr.rel (0) target = $region21
    $region20: #{tpu_custom_call.1} parent=1 // pred_region
      %33 = dma.done [#allocation3], 512
    $region21: #{tpu_custom_call.1} parent=1 // pred_fallthru
      _
    %v35 = vld [vmem:[#allocation2] sm:$0xff]
    %v36 = vld [vmem:[#allocation2 + $0x8] sm:$0xff]
    %v37 = vld [vmem:[#allocation2 + $0x10] sm:$0xff]
    %v38 = vld [vmem:[#allocation2 + $0x18] sm:$0xff]
    %v39 = vld [vmem:[%s2] sm:$0x3]
    %v40 = vld [vmem:[%s0] sm:$0xf]
    %v41 = vld [vmem:[%s0 + $0x4] sm:$0xf]
    %v42 = vld [vmem:[%s3] sm:$0xff]
    %v43 = vld [vmem:[%s3 + $0x8] sm:$0xff]
    %45 = vset.pattern.permute.xlu0 0
    %46 = vperm.xlu0 %45, %v42
    %v47 = vpop.permute.xlu0 %46
    %50 = vset.pattern.permute.xlu0 0
    %51 = vperm.xlu0 %50, %v43
    %v52 = vpop.permute.xlu0 %51
    %v56 = vunpack.c.l.b16 %v40
    %v57 = vunpack.c.l.b16 %v41
    %v58 = vpack.c.b16 %v57, %v56
    %v63 = vunpack.c.l.b16 %v35
    %v64 = vunpack.c.h.b16 %v35
    %v65 = vunpack.c.l.b16 %v36
    %v66 = vunpack.c.h.b16 %v36
    %v67 = vunpack.c.l.b16 %v37
    %v68 = vunpack.c.h.b16 %v37
    %v69 = vunpack.c.l.b16 %v38
    %v70 = vunpack.c.h.b16 %v38
    %v71 = vpack.c.b16 %v65, %v63
    %v72 = vpack.c.b16 %v66, %v64
    %v73 = vpack.c.b16 %v69, %v67
    %v74 = vpack.c.b16 %v70, %v68
    %vm79 = vcmask 261120
    %v81 = vsel %vm79, %v58, 0
    %83 = vmatpush.bf16.msra.mxu0 0
    %84 = vmatpush.bf16.msra.mxu0 0
    %85 = vmatpush.bf16.msra.mxu0 0
    %86 = vmatpush.bf16.msra.mxu0 0
    %87 = vmatpush.bf16.msra.mxu0 0
    %88 = vmatpush.bf16.msra.mxu0 0
    %89 = vmatpush.bf16.msra.mxu0 %v73
    %90 = vmatpush.bf16.msra.mxu0 %v71
    %91 = vmatmul.bf16.gmra.mxu0 %v81
    %v92 = vpop.f32.mrf.mxu0
    %v93 = vadd.f32 %v47, %v92
    %v94 = vpop.f32.mrf.mxu0
    %v95 = vadd.f32 %v52, %v94
    %96 = vdwg.mxu0
    %97 = vmatpush.bf16.msra.mxu0 0
    %98 = vmatpush.bf16.msra.mxu0 0
    %99 = vmatpush.bf16.msra.mxu0 0
    %100 = vmatpush.bf16.msra.mxu0 0
    %101 = vmatpush.bf16.msra.mxu0 0
    %102 = vmatpush.bf16.msra.mxu0 0
    %103 = vmatpush.bf16.msra.mxu0 %v74
    %104 = vmatpush.bf16.msra.mxu0 %v72
    %105 = vmatmul.bf16.gmra.mxu0 %v81
    %v106 = vpop.f32.mrf.mxu0
    %v107 = vadd.f32 %v47, %v106
    %v108 = vpop.f32.mrf.mxu0
    %v109 = vadd.f32 %v52, %v108
    %110 = vdwg.mxu0
    %v111 = vrot.slane %v93, 4
    %v112 = vmax.f32 %v93, %v111
    %v113 = vrot.slane %v112, 2
    %v114 = vmax.f32 %v112, %v113
    %v115 = vrot.slane %v114, 1
    %v116 = vmax.f32 %v114, %v115
    %v117 = vrot.slane %v107, 4
    %v118 = vmax.f32 %v107, %v117
    %v119 = vrot.slane %v118, 2
    %v120 = vmax.f32 %v118, %v119
    %v121 = vrot.slane %v120, 1
    %v122 = vmax.f32 %v120, %v121
    %v123 = vrot.slane %v95, 4
    %v124 = vmax.f32 %v95, %v123
    %v125 = vrot.slane %v124, 2
    %v126 = vmax.f32 %v124, %v125
    %v127 = vrot.slane %v126, 1
    %v128 = vmax.f32 %v126, %v127
    %v129 = vrot.slane %v109, 4
    %v130 = vmax.f32 %v109, %v129
    %v131 = vrot.slane %v130, 2
    %v132 = vmax.f32 %v130, %v131
    %v133 = vrot.slane %v132, 1
    %v134 = vmax.f32 %v132, %v133
    %v136 = vperm.slane %v39, 0
    %v137 = vperm.slane %v39, 1
    %v140 = vadd.f32 %v116, %v136
    %v141 = vadd.f32 %v122, %v137
    %v142 = vadd.f32 %v128, %v136
    %v143 = vadd.f32 %v134, %v137
    %v144 = vmax.f32 %v140, 0.0
    %v145 = vmax.f32 %v141, 0.0
    %v146 = vmax.f32 %v142, 0.0
    %v147 = vmax.f32 %v143, 0.0
    %v148 = vadd.f32 %v144, 1.0
    %v149 = vlog2.pop %v148
    %v150 = vmul.f32 %v149, 0.6931472
    %v151 = vmul.f32 -0.5, %v144
    %v152 = vadd.f32 %v151, 1.0
    %v153 = vmul.f32 %v152, %v144
    %v154 = vand.u32 2147483647, %v144
    %vm155 = vcmp.lt.f32.partialorder %v154, 0.0004427343
    %v156 = vsel %vm155, %v153, %v150
    %v157 = vadd.f32 %v145, 1.0
    %v158 = vlog2.pop %v157
    %v159 = vmul.f32 %v158, 0.6931472
    %v160 = vmul.f32 -0.5, %v145
    %v161 = vadd.f32 %v160, 1.0
    %v162 = vmul.f32 %v161, %v145
    %v163 = vand.u32 2147483647, %v145
    %vm164 = vcmp.lt.f32.partialorder %v163, 0.0004427343
    %v165 = vsel %vm164, %v162, %v159
    %v166 = vadd.f32 %v146, 1.0
    %v167 = vlog2.pop %v166
    %v168 = vmul.f32 %v167, 0.6931472
    %v169 = vmul.f32 -0.5, %v146
    %v170 = vadd.f32 %v169, 1.0
    %v171 = vmul.f32 %v170, %v146
    %v172 = vand.u32 2147483647, %v146
    %vm173 = vcmp.lt.f32.partialorder %v172, 0.0004427343
    %v174 = vsel %vm173, %v171, %v168
    %v175 = vadd.f32 %v147, 1.0
    %v176 = vlog2.pop %v175
    %v177 = vmul.f32 %v176, 0.6931472
    %v178 = vmul.f32 -0.5, %v147
    %v179 = vadd.f32 %v178, 1.0
    %v180 = vmul.f32 %v179, %v147
    %v181 = vand.u32 2147483647, %v147
    %vm182 = vcmp.lt.f32.partialorder %v181, 0.0004427343
    %v183 = vsel %vm182, %v180, %v177
    %v188 = vrot.slane %v165, 6
    %v189 = vrot.slane %v183, 6
    %vm190 = vcmask 1041408
    %v191 = vsel %vm190, %v156, %v188
    %v192 = vsel %vm190, %v174, %v189
    %vm193 = vcmask 1044484
    %v194 = vsel %vm193, %v191, %v191
    %vm195 = vcmask 1046534
    %v196 = vsel %vm195, %v191, %v194
    %v197 = vrot.slane %v192, 7
    %vm198 = vcmask 1041409
    %v199 = vsel %vm198, %v197, %v196
    %vm200 = vcmask 1043459
    %v201 = vsel %vm200, %v197, %v199
    %vm202 = vcmask 1045509
    %v203 = vsel %vm202, %v197, %v201
    %vm204 = vcmask 1047559
    %v205 = vsel %vm204, %v197, %v203
    %207 = vst [vmem:[#allocation5] sm:$0xf] %v205
    // Predicated region
    $region22: #{tpu_custom_call.1} parent=1 // pred_check
      _
    $region23: #{tpu_custom_call.1} parent=1 // pred_check_branch
      %209 = sbr.rel (0) target = $region25
    $region24: #{tpu_custom_call.1} parent=1 // pred_region
      %211 = vsyncadd [#allocation4], 0
      %s213 = sshll.u32 [#allocation5], 4
      %s214 = int_to_ptr.vmem [resolvable:$true] %s213
      %s215 = sshll.u32 %s4, 4
      %s216 = int_to_ptr.hbm [resolvable:$true] %s215
      %218 = dma.vmem_to_hbm [thread:$0]  %s214, 64, %s216, [#allocation4]
    $region25: #{tpu_custom_call.1} parent=1 // pred_fallthru
      _
    // Predicated region
    $region26: #{tpu_custom_call.1} parent=1 // pred_check
      _
    $region27: #{tpu_custom_call.1} parent=1 // pred_check_branch
      %220 = sbr.rel (0) target = $region29
    $region28: #{tpu_custom_call.1} parent=1 // pred_region
      %222 = dma.done [#allocation4], 64
    $region29: #{tpu_custom_call.1} parent=1 // pred_fallthru
      _
    %223 = vsyncpa [#allocation3], 1
    %224 = vsyncpa [#allocation4], 1

</llo_original>
